<compile_context>
chip_gen: v7x
topology: tpu7x:2x2x1
jax: 0.10.0
libtpu: 0.0.40
codegen_flags: <defaults>
</compile_context>

<pallas_src>
import math

import jax
import jax.numpy as jnp
import numpy as np
from jax.experimental import pallas as pl
from jax.experimental.pallas import tpu as pltpu

EMBED_DIM = 32
HIDDEN_DIM = 64
NUM_HEADS = 4
HEAD_DIM = EMBED_DIM // NUM_HEADS
SEQ = 8
BATCH = 2
LN_EPS = 1e-5

TOK = BATCH * SEQ            # tokens processed per call (16)
HN = NUM_HEADS * TOK         # fused (head, token) score width (64)

# ---- packed parameter/constant slab layout (f32, lane segments 128-aligned, rows 8-aligned) ----
LANES = 3 * 128              # 384
ROW_W1 = 0                   # rows [0,32):   lanes 0:128  = [Wq^T*s | Wk^T | Wv^T | 0]
                             #                lanes 128:160 = Wo^T ; lanes 256:320 = Wlin1^T
ROW_W2 = EMBED_DIM           # rows [32,96):  lanes 0:32   = Wlin2^T
ROW_HM = ROW_W2 + HIDDEN_DIM # rows [96,160): lanes 0:96   = head mask tiled x3
ROW_AM = ROW_HM + HN         # rows [160,176):lanes 0:64   = additive batch mask (0 / -1e30)
ROW_B = ROW_AM + TOK         # rows [176,184): bias rows (bqkv_ext, bo, gamma, beta, b1, b2)
ROWS = ROW_B + 8             # 184


def attention_block_kernel(x_ref, p_ref, o_ref):
    E, H, D, NH = EMBED_DIM, HIDDEN_DIM, HEAD_DIM, NUM_HEADS

    x = x_ref[...]                                           # (TOK, E)

    # ---- fused QKV projection; q-scale already folded; 4th block of output is all-ones
    #      (used below to get the softmax denominators out of the PV matmul for free) ----
    wqkv = p_ref[ROW_W1:ROW_W1 + E, 0:4 * E]                 # (E, 128)
    bqkv = p_ref[ROW_B + 0:ROW_B + 1, 0:4 * E]               # (1, 128)
    qkv = jnp.dot(x, wqkv, preferred_element_type=jnp.float32) + bqkv   # (TOK, 128) = [q|k|v|1]

    q = qkv[:, 0:E]                                          # (TOK, E), pre-scaled by 1/sqrt(D)
    kv1 = qkv[:, E:4 * E]                                    # (TOK, 3E) = [k | v | 1]

    # ---- block-diagonal slab: all heads and both batch elements in ONE score / PV pass ----
    # host constant: mask96[r, c] = 1 iff slab-row head (r // TOK) == column head ((c % E) // D)
    mask96 = p_ref[ROW_HM:ROW_HM + HN, 0:3 * E]              # (HN, 3E)
    kv_bd = jnp.concatenate([kv1] * NH, axis=0) * mask96     # (HN, 3E)
    k_bd = kv_bd[:, 0:E]                                     # (HN, E)   block-diagonal keys
    v_cat = kv_bd[:, E:3 * E]                                # (HN, 2E)  [block-diag V | head ind.]

    # scores[r, h*TOK + t] = (q_h[r]/sqrt(D)) . k_h[t] ; additive batch mask (host constant).
    # NOTE: -1e30 (not -inf) so masked entries underflow to exactly 0 after exp.
    add_mask = p_ref[ROW_AM:ROW_AM + TOK, 0:HN]              # (TOK, HN)
    s = jax.lax.dot_general(q, k_bd, (((1,), (1,)), ((), ())),
                            preferred_element_type=jnp.float32) + add_mask   # (TOK, HN)

    # Per-(row, head-block) softmax using the global row max as shift (shift-invariant per block).
    m = jnp.max(s, axis=-1, keepdims=True)
    p = jnp.exp(s - m)                                       # masked entries -> 0

    # One fused PV matmul: left E lanes = unnormalised head outputs (already concatenated),
    # right E lanes = per-head denominators replicated across that head's lanes.
    z = jnp.dot(p, v_cat, preferred_element_type=jnp.float32)          # (TOK, 2E)
    denom = jnp.maximum(z[:, E:2 * E], 1e-30)                # clamp: guards exp-underflowed blocks
    attn = z[:, 0:E] * pl.reciprocal(denom, approx=True)     # (TOK, E)

    wo = p_ref[ROW_W1:ROW_W1 + E, 4 * E:5 * E]               # (E, E)
    bo = p_ref[ROW_B + 1:ROW_B + 2, 0:E]
    attn = jnp.dot(attn, wo, preferred_element_type=jnp.float32) + bo

    # ---- residual + LayerNorm (dropout1 is identity, p=0) ----
    y = x + attn
    mean = jnp.mean(y, axis=-1, keepdims=True)
    var = jnp.mean((y - mean) ** 2, axis=-1, keepdims=True)
    gamma = p_ref[ROW_B + 2:ROW_B + 3, 0:E]
    beta = p_ref[ROW_B + 3:ROW_B + 4, 0:E]
    yn = (y - mean) * jax.lax.rsqrt(var + LN_EPS) * gamma + beta

    # ---- MLP: Linear -> exact (erf) GELU -> Linear, residual (dropout2 identity) ----
    w1 = p_ref[ROW_W1:ROW_W1 + E, 8 * E:8 * E + H]           # (E, H)
    b1 = p_ref[ROW_B + 4:ROW_B + 5, 0:H]
    h1 = jnp.dot(yn, w1, preferred_element_type=jnp.float32) + b1
    g = 0.5 * h1 * (1.0 + jax.lax.erf(h1 * (1.0 / math.sqrt(2.0))))
    w2 = p_ref[ROW_W2:ROW_W2 + H, 0:E]                       # (H, E)
    b2 = p_ref[ROW_B + 5:ROW_B + 6, 0:E]
    h2 = jnp.dot(g, w2, preferred_element_type=jnp.float32) + b2

    o_ref[...] = yn + h2


def pack_params(params):
    """Host-side packing of all weights / biases / constant masks into one lane-aligned slab."""
    E, H, D = EMBED_DIM, HIDDEN_DIM, HEAD_DIM
    scale = 1.0 / math.sqrt(D)

    wq, wk, wv = np.split(np.asarray(params["in_proj_w"], np.float32), 3, axis=0)   # (E,E) each
    bq, bk, bv = np.split(np.asarray(params["in_proj_b"], np.float32), 3)
    # Fold query scale into Q; append a zero weight / ones bias block -> qkv output = [q|k|v|1].
    wqkv_ext = np.concatenate([scale * wq.T, wk.T, wv.T, np.zeros((E, E), np.float32)], axis=1)
    bqkv_ext = np.concatenate([scale * bq, bk, bv, np.ones((E,), np.float32)])

    # Block-diagonal head mask: slab row r belongs to head r // TOK, embed column c to head c // D.
    head_mask = (np.arange(HN)[:, None] // TOK ==
                 np.arange(E)[None, :] // D).astype(np.float32)            # (HN, E)
    mask96 = np.tile(head_mask, (1, 3))                                    # masks [k | v | ones]

    # Additive batch mask: query row attends only to keys of its own batch element.
    qb = np.arange(TOK)[:, None] // SEQ
    kb = (np.arange(HN)[None, :] % TOK) // SEQ
    add_mask = np.where(qb == kb, 0.0, -1e30).astype(np.float32)           # (TOK, HN)

    slab = np.zeros((ROWS, LANES), np.float32)
    slab[ROW_W1:ROW_W1 + E, 0:4 * E] = wqkv_ext
    slab[ROW_W1:ROW_W1 + E, 4 * E:5 * E] = np.asarray(params["out_proj_w"], np.float32).T
    slab[ROW_W1:ROW_W1 + E, 8 * E:8 * E + H] = np.asarray(params["lin1_w"], np.float32).T
    slab[ROW_W2:ROW_W2 + H, 0:E] = np.asarray(params["lin2_w"], np.float32).T
    slab[ROW_HM:ROW_HM + HN, 0:3 * E] = mask96
    slab[ROW_AM:ROW_AM + TOK, 0:HN] = add_mask
    slab[ROW_B + 0, 0:4 * E] = bqkv_ext
    slab[ROW_B + 1, 0:E] = np.asarray(params["out_proj_b"], np.float32)
    slab[ROW_B + 2, 0:E] = np.asarray(params["ln_gamma"], np.float32)
    slab[ROW_B + 3, 0:E] = np.asarray(params["ln_beta"], np.float32)
    slab[ROW_B + 4, 0:H] = np.asarray(params["lin1_b"], np.float32)
    slab[ROW_B + 5, 0:E] = np.asarray(params["lin2_b"], np.float32)
    return jnp.asarray(slab)


def attention_block(x, slab):
    B, S, E = x.shape
    x2d = x.reshape(B * S, E)
    out2d = pl.pallas_call(
        attention_block_kernel,
        out_shape=jax.ShapeDtypeStruct((B * S, E), jnp.float32),
        in_specs=[pl.BlockSpec(memory_space=pltpu.MemorySpace.VMEM),
                  pl.BlockSpec(memory_space=pltpu.MemorySpace.VMEM)],
        out_specs=pl.BlockSpec(memory_space=pltpu.MemorySpace.VMEM),
    )(x2d, slab)
    return out2d.reshape(B, S, E)


def reference(x, params):
    """Pure-JAX reference mirroring PyTorch semantics (correctness check)."""
    B, S, E = x.shape
    qkv = x @ params["in_proj_w"].T + params["in_proj_b"]
    q, k, v = qkv[..., :E], qkv[..., E:2 * E], qkv[..., 2 * E:]

    def heads(t):  # (B, S, E) -> (B, nh, S, hd)
        return t.reshape(B, S, NUM_HEADS, HEAD_DIM).transpose(0, 2, 1, 3)

    qh, kh, vh = heads(q), heads(k), heads(v)
    s = jnp.einsum("bhqd,bhkd->bhqk", qh, kh) / math.sqrt(HEAD_DIM)
    p = jax.nn.softmax(s, axis=-1)
    o = jnp.einsum("bhqk,bhkd->bhqd", p, vh).transpose(0, 2, 1, 3).reshape(B, S, E)
    attn = o @ params["out_proj_w"].T + params["out_proj_b"]

    y = x + attn
    mean = jnp.mean(y, axis=-1, keepdims=True)
    var = jnp.mean((y - mean) ** 2, axis=-1, keepdims=True)
    yn = (y - mean) / jnp.sqrt(var + LN_EPS) * params["ln_gamma"] + params["ln_beta"]

    h1 = yn @ params["lin1_w"].T + params["lin1_b"]
    g = 0.5 * h1 * (1.0 + jax.lax.erf(h1 / math.sqrt(2.0)))
    h2 = g @ params["lin2_w"].T + params["lin2_b"]
    return yn + h2


def init_params(key):
    ks = jax.random.split(key, 8)
    sc = 0.05
    return {
        "in_proj_w": sc * jax.random.normal(ks[0], (3 * EMBED_DIM, EMBED_DIM), jnp.float32),
        "in_proj_b": sc * jax.random.normal(ks[1], (3 * EMBED_DIM,), jnp.float32),
        "out_proj_w": sc * jax.random.normal(ks[2], (EMBED_DIM, EMBED_DIM), jnp.float32),
        "out_proj_b": sc * jax.random.normal(ks[3], (EMBED_DIM,), jnp.float32),
        "ln_gamma": jnp.ones((EMBED_DIM,), jnp.float32),
        "ln_beta": jnp.zeros((EMBED_DIM,), jnp.float32),
        "lin1_w": sc * jax.random.normal(ks[4], (HIDDEN_DIM, EMBED_DIM), jnp.float32),
        "lin1_b": sc * jax.random.normal(ks[5], (HIDDEN_DIM,), jnp.float32),
        "lin2_w": sc * jax.random.normal(ks[6], (EMBED_DIM, HIDDEN_DIM), jnp.float32),
        "lin2_b": sc * jax.random.normal(ks[7], (EMBED_DIM,), jnp.float32),
    }


if __name__ == "__main__":
    key = jax.random.PRNGKey(0)
    kx, kp = jax.random.split(key)
    x = jax.random.normal(kx, (BATCH, SEQ, EMBED_DIM), jnp.float32)
    params = init_params(kp)
    slab = pack_params(params)

    out = jax.block_until_ready(attention_block(x, slab))
    ref = jax.block_until_ready(reference(x, params))

    # Tolerance 1e-3: the softmax denominator uses the EUP approximate reciprocal (documented
    # accuracy trade recommended by the performance review).
    np.testing.assert_allclose(np.asarray(out), np.asarray(ref), atol=1e-3, rtol=1e-3)
    print("KERNEL_OK")
</pallas_src>

<mosaic_0001>
module attributes {stable_mosaic.version = 11 : i64} {
  func.func @attention_block_kernel(%arg0: memref<16x32xf32, #tpu.memory_space<vmem>>, %arg1: memref<184x384xf32, #tpu.memory_space<vmem>>, %arg2: memref<16x32xf32, #tpu.memory_space<vmem>>) attributes {dimension_semantics = [], scalar_prefetch = 0 : i64, scratch_operands = 0 : i64, tpu.core_type = #tpu.core_type<tc>} {
    %c0 = arith.constant 0 : index
    %c0_0 = arith.constant 0 : index
    %0 = vector.load %arg0[%c0, %c0_0] : memref<16x32xf32, #tpu.memory_space<vmem>>, vector<16x32xf32>
    %c0_1 = arith.constant 0 : index
    %c0_2 = arith.constant 0 : index
    %1 = vector.load %arg1[%c0_1, %c0_2] : memref<184x384xf32, #tpu.memory_space<vmem>>, vector<32x128xf32>
    %c176 = arith.constant 176 : index
    %c0_3 = arith.constant 0 : index
    %2 = vector.load %arg1[%c176, %c0_3] : memref<184x384xf32, #tpu.memory_space<vmem>>, vector<1x128xf32>
    %cst = arith.constant dense<0.000000e+00> : vector<16x128xf32>
    %3 = tpu.matmul %0, %1, %cst {dimension_numbers = #tpu.dot_dimension_numbers<[1], [0], [0], [1], [0, 0, 1, 1], [], []>} : vector<16x32xf32>, vector<32x128xf32>, vector<16x128xf32> -> vector<16x128xf32>
    %4 = vector.broadcast %2 : vector<1x128xf32> to vector<16x128xf32>
    %5 = arith.addf %3, %4 : vector<16x128xf32>
    %6 = vector.extract_strided_slice %5 {offsets = [0, 0], sizes = [16, 32], strides = [1, 1]} : vector<16x128xf32> to vector<16x32xf32>
    %7 = vector.extract_strided_slice %5 {offsets = [0, 32], sizes = [16, 96], strides = [1, 1]} : vector<16x128xf32> to vector<16x96xf32>
    %c96 = arith.constant 96 : index
    %c0_4 = arith.constant 0 : index
    %8 = vector.load %arg1[%c96, %c0_4] : memref<184x384xf32, #tpu.memory_space<vmem>>, vector<64x96xf32>
    %9 = tpu.concatenate %7, %7, %7, %7 in 0 : vector<16x96xf32>, vector<16x96xf32>, vector<16x96xf32>, vector<16x96xf32> -> vector<64x96xf32>
    %10 = arith.mulf %9, %8 : vector<64x96xf32>
    %11 = vector.extract_strided_slice %10 {offsets = [0, 0], sizes = [64, 32], strides = [1, 1]} : vector<64x96xf32> to vector<64x32xf32>
    %12 = vector.extract_strided_slice %10 {offsets = [0, 32], sizes = [64, 64], strides = [1, 1]} : vector<64x96xf32> to vector<64x64xf32>
    %c160 = arith.constant 160 : index
    %c0_5 = arith.constant 0 : index
    %13 = vector.load %arg1[%c160, %c0_5] : memref<184x384xf32, #tpu.memory_space<vmem>>, vector<16x64xf32>
    %cst_6 = arith.constant dense<0.000000e+00> : vector<16x64xf32>
    %14 = tpu.matmul %6, %11, %cst_6 {dimension_numbers = #tpu.dot_dimension_numbers<[1], [1], [0], [0], [0, 0, 1, 0], [], []>} : vector<16x32xf32>, vector<64x32xf32>, vector<16x64xf32> -> vector<16x64xf32>
    %15 = arith.addf %14, %13 : vector<16x64xf32>
    %cst_7 = arith.constant dense<0xFF800000> : vector<16xf32>
    %16 = vector.multi_reduction <maximumf>, %15, %cst_7 [1] : vector<16x64xf32> to vector<16xf32>
    %17 = vector.shape_cast %16 : vector<16xf32> to vector<16x1xf32>
    %18 = vector.broadcast %17 : vector<16x1xf32> to vector<16x64xf32>
    %19 = arith.subf %15, %18 : vector<16x64xf32>
    %20 = math.exp %19 : vector<16x64xf32>
    %cst_8 = arith.constant dense<0.000000e+00> : vector<16x64xf32>
    %21 = tpu.matmul %20, %12, %cst_8 {dimension_numbers = #tpu.dot_dimension_numbers<[1], [0], [0], [1], [0, 0, 1, 1], [], []>} : vector<16x64xf32>, vector<64x64xf32>, vector<16x64xf32> -> vector<16x64xf32>
    %22 = vector.extract_strided_slice %21 {offsets = [0, 32], sizes = [16, 32], strides = [1, 1]} : vector<16x64xf32> to vector<16x32xf32>
    %cst_9 = arith.constant 1.000000e-30 : f32
    %23 = vector.broadcast %cst_9 : f32 to vector<16x32xf32>
    %24 = arith.maximumf %22, %23 : vector<16x32xf32>
    %25 = vector.extract_strided_slice %21 {offsets = [0, 0], sizes = [16, 32], strides = [1, 1]} : vector<16x64xf32> to vector<16x32xf32>
    %26 = tpu.reciprocal %24 {approx = true} : vector<16x32xf32> -> vector<16x32xf32>
    %27 = arith.mulf %25, %26 : vector<16x32xf32>
    %c0_10 = arith.constant 0 : index
    %c128 = arith.constant 128 : index
    %28 = vector.load %arg1[%c0_10, %c128] : memref<184x384xf32, #tpu.memory_space<vmem>>, vector<32x32xf32>
    %c177 = arith.constant 177 : index
    %c0_11 = arith.constant 0 : index
    %29 = vector.load %arg1[%c177, %c0_11] : memref<184x384xf32, #tpu.memory_space<vmem>>, vector<1x32xf32>
    %cst_12 = arith.constant dense<0.000000e+00> : vector<16x32xf32>
    %30 = tpu.matmul %27, %28, %cst_12 {dimension_numbers = #tpu.dot_dimension_numbers<[1], [0], [0], [1], [0, 0, 1, 1], [], []>} : vector<16x32xf32>, vector<32x32xf32>, vector<16x32xf32> -> vector<16x32xf32>
    %31 = vector.broadcast %29 : vector<1x32xf32> to vector<16x32xf32>
    %32 = arith.addf %30, %31 : vector<16x32xf32>
    %33 = arith.addf %0, %32 : vector<16x32xf32>
    %cst_13 = arith.constant dense<0.000000e+00> : vector<16xf32>
    %34 = vector.multi_reduction <add>, %33, %cst_13 [1] : vector<16x32xf32> to vector<16xf32>
    %35 = vector.shape_cast %34 : vector<16xf32> to vector<16x1xf32>
    %cst_14 = arith.constant 3.200000e+01 : f32
    %36 = vector.broadcast %cst_14 : f32 to vector<16x1xf32>
    %37 = arith.divf %35, %36 : vector<16x1xf32>
    %38 = vector.broadcast %37 : vector<16x1xf32> to vector<16x32xf32>
    %39 = arith.subf %33, %38 : vector<16x32xf32>
    %40 = arith.mulf %39, %39 : vector<16x32xf32>
    %cst_15 = arith.constant dense<0.000000e+00> : vector<16xf32>
    %41 = vector.multi_reduction <add>, %40, %cst_15 [1] : vector<16x32xf32> to vector<16xf32>
    %42 = vector.shape_cast %41 : vector<16xf32> to vector<16x1xf32>
    %cst_16 = arith.constant 3.200000e+01 : f32
    %43 = vector.broadcast %cst_16 : f32 to vector<16x1xf32>
    %44 = arith.divf %42, %43 : vector<16x1xf32>
    %c178 = arith.constant 178 : index
    %c0_17 = arith.constant 0 : index
    %45 = vector.load %arg1[%c178, %c0_17] : memref<184x384xf32, #tpu.memory_space<vmem>>, vector<1x32xf32>
    %c179 = arith.constant 179 : index
    %c0_18 = arith.constant 0 : index
    %46 = vector.load %arg1[%c179, %c0_18] : memref<184x384xf32, #tpu.memory_space<vmem>>, vector<1x32xf32>
    %47 = vector.broadcast %37 : vector<16x1xf32> to vector<16x32xf32>
    %48 = arith.subf %33, %47 : vector<16x32xf32>
    %cst_19 = arith.constant 9.99999974E-6 : f32
    %49 = vector.broadcast %cst_19 : f32 to vector<16x1xf32>
    %50 = arith.addf %44, %49 : vector<16x1xf32>
    %51 = math.rsqrt %50 : vector<16x1xf32>
    %52 = vector.broadcast %51 : vector<16x1xf32> to vector<16x32xf32>
    %53 = arith.mulf %48, %52 : vector<16x32xf32>
    %54 = vector.broadcast %45 : vector<1x32xf32> to vector<16x32xf32>
    %55 = arith.mulf %53, %54 : vector<16x32xf32>
    %56 = vector.broadcast %46 : vector<1x32xf32> to vector<16x32xf32>
    %57 = arith.addf %55, %56 : vector<16x32xf32>
    %c0_20 = arith.constant 0 : index
    %c256 = arith.constant 256 : index
    %58 = vector.load %arg1[%c0_20, %c256] : memref<184x384xf32, #tpu.memory_space<vmem>>, vector<32x64xf32>
    %c180 = arith.constant 180 : index
    %c0_21 = arith.constant 0 : index
    %59 = vector.load %arg1[%c180, %c0_21] : memref<184x384xf32, #tpu.memory_space<vmem>>, vector<1x64xf32>
    %cst_22 = arith.constant dense<0.000000e+00> : vector<16x64xf32>
    %60 = tpu.matmul %57, %58, %cst_22 {dimension_numbers = #tpu.dot_dimension_numbers<[1], [0], [0], [1], [0, 0, 1, 1], [], []>} : vector<16x32xf32>, vector<32x64xf32>, vector<16x64xf32> -> vector<16x64xf32>
    %61 = vector.broadcast %59 : vector<1x64xf32> to vector<16x64xf32>
    %62 = arith.addf %60, %61 : vector<16x64xf32>
    %cst_23 = arith.constant 5.000000e-01 : f32
    %63 = vector.broadcast %cst_23 : f32 to vector<16x64xf32>
    %64 = arith.mulf %63, %62 : vector<16x64xf32>
    %cst_24 = arith.constant 0.707106769 : f32
    %65 = vector.broadcast %cst_24 : f32 to vector<16x64xf32>
    %66 = arith.mulf %62, %65 : vector<16x64xf32>
    %67 = math.erf %66 : vector<16x64xf32>
    %cst_25 = arith.constant 1.000000e+00 : f32
    %68 = vector.broadcast %cst_25 : f32 to vector<16x64xf32>
    %69 = arith.addf %68, %67 : vector<16x64xf32>
    %70 = arith.mulf %64, %69 : vector<16x64xf32>
    %c32 = arith.constant 32 : index
    %c0_26 = arith.constant 0 : index
    %71 = vector.load %arg1[%c32, %c0_26] : memref<184x384xf32, #tpu.memory_space<vmem>>, vector<64x32xf32>
    %c181 = arith.constant 181 : index
    %c0_27 = arith.constant 0 : index
    %72 = vector.load %arg1[%c181, %c0_27] : memref<184x384xf32, #tpu.memory_space<vmem>>, vector<1x32xf32>
    %cst_28 = arith.constant dense<0.000000e+00> : vector<16x32xf32>
    %73 = tpu.matmul %70, %71, %cst_28 {dimension_numbers = #tpu.dot_dimension_numbers<[1], [0], [0], [1], [0, 0, 1, 1], [], []>} : vector<16x64xf32>, vector<64x32xf32>, vector<16x32xf32> -> vector<16x32xf32>
    %74 = vector.broadcast %72 : vector<1x32xf32> to vector<16x32xf32>
    %75 = arith.addf %73, %74 : vector<16x32xf32>
    %76 = arith.addf %57, %75 : vector<16x32xf32>
    %c0_29 = arith.constant 0 : index
    %c0_30 = arith.constant 0 : index
    %77 = vector.load %arg2[%c0_29, %c0_30] : memref<16x32xf32, #tpu.memory_space<vmem>>, vector<16x32xf32>
    tpu.vector_store %arg2[%c0_29, %c0_30], %76 {strides = array<i32>} : memref<16x32xf32, #tpu.memory_space<vmem>>, vector<16x32xf32>,
    return
  }
}

</mosaic_0001>

<llo_original>
// kernel: tpu_custom_call.1
$region0: #{tpu_custom_call.1}
  #allocation0 [shape = 'u32[]', space=smem, size = 0x4, offset = 0x4, fixed_abs, tag = 'smem constant byte address 0x4 - core index']
  #allocation1 [shape = 'u32[144,128]{1,0:T(1,128)}', space=vmem, size = 0x12000, scoped, tag = 'internal scratch']
  %s0 = inlined_call_operand.hbm [shape: f32[16,32], index: 0, kind: input, shape index: {}]
  %s1 = inlined_call_operand.hbm [shape: f32[184,384], index: 1, kind: input, shape index: {}]
  %s2 = inlined_call_operand.hbm [shape: f32[16,32], index: 2, kind: output, shape index: {}]
  %s3 = sld [smem:[#allocation0]]
  $region26: #{tpu_custom_call.1} parent=0
    _
  %s5 = ssub.s32 1, %s3
  %s6 = scalar_select 0, %s5, %s3
  $region1: #{tpu_custom_call.1} parent=0
    #allocation2 [shape = 'u8[8192]{0}', space=vmem, size = 0x2000, scoped, tag = 'input window, operand 0, single buffered']
    #allocation3 [shape = 's32[1]{0}', space=sflag, size = 0x4, scoped, tag = 'scoped memory for tpu_custom_call.1']
    #allocation4 [shape = 's32[1]{0}', space=sflag, size = 0x4, scoped, tag = 'scoped memory for tpu_custom_call.1']
    #allocation5 [shape = 'u8[282624]{0}', space=vmem, size = 0x45000, scoped, tag = 'input window, operand 1, single buffered']
    #allocation6 [shape = 's32[1]{0}', space=sflag, size = 0x4, scoped, tag = 'scoped memory for tpu_custom_call.1']
    #allocation7 [shape = 'u8[8192]{0}', space=vmem, size = 0x2000, scoped, tag = 'output window, operand 0, single buffered']
    %7 = vsyncpa [#allocation3], 0
    %8 = vsyncpa [#allocation6], 0
    %9 = vsyncpa [#allocation4], 0
    // Predicated region
    $region2: #{tpu_custom_call.1} parent=1 // pred_check
      _
    $region3: #{tpu_custom_call.1} parent=1 // pred_check_branch
      %11 = sbr.rel (0) target = $region5
    $region4: #{tpu_custom_call.1} parent=1 // pred_region
      %s13 = ssub.s32 256, 256
      %14 = vsyncadd [#allocation3], %s13
      %s15 = sshll.u32 [#allocation2], 4
      %s16 = int_to_ptr.vmem [resolvable:$true] %s15
      %21 = dma.hbm_to_vmem [thread:$0]  %s0, 256, %s16, [#allocation3], 128, 128, 8
    $region5: #{tpu_custom_call.1} parent=1 // pred_fallthru
      _
    // Predicated region
    $region6: #{tpu_custom_call.1} parent=1 // pred_check
      _
    $region7: #{tpu_custom_call.1} parent=1 // pred_check_branch
      %23 = sbr.rel (0) target = $region9
    $region8: #{tpu_custom_call.1} parent=1 // pred_region
      %s25 = ssub.s32 8832, 8832
      %26 = vsyncadd [#allocation6], %s25
      %s27 = sshll.u32 [#allocation5], 4
      %s28 = int_to_ptr.vmem [resolvable:$true] %s27
      %33 = dma.hbm_to_vmem [thread:$0]  %s1, 8832, %s28, [#allocation6], 384, 384, 24
    $region9: #{tpu_custom_call.1} parent=1 // pred_fallthru
      _
    // Predicated region
    $region10: #{tpu_custom_call.1} parent=1 // pred_check
      _
    $region11: #{tpu_custom_call.1} parent=1 // pred_check_branch
      %35 = sbr.rel (0) target = $region13
    $region12: #{tpu_custom_call.1} parent=1 // pred_region
      %36 = dma.done [#allocation3], 256
    $region13: #{tpu_custom_call.1} parent=1 // pred_fallthru
      _
    // Predicated region
    $region14: #{tpu_custom_call.1} parent=1 // pred_check
      _
    $region15: #{tpu_custom_call.1} parent=1 // pred_check_branch
      %38 = sbr.rel (0) target = $region17
    $region16: #{tpu_custom_call.1} parent=1 // pred_region
      %39 = dma.done [#allocation6], 8832
    $region17: #{tpu_custom_call.1} parent=1 // pred_fallthru
      _
    %v40 = vld [vmem:[#allocation2] sm:$0xff]
    %v41 = vld [vmem:[#allocation2 + $0x8] sm:$0xff]
    %v42 = vld [vmem:[#allocation5] sm:$0xff]
    %v43 = vld [vmem:[#allocation5 + $0x18] sm:$0xff]
    %v44 = vld [vmem:[#allocation5 + $0x30] sm:$0xff]
    %v45 = vld [vmem:[#allocation5 + $0x48] sm:$0xff]
    %v46 = vld [vmem:[#allocation5 + $0x210] ss:$0 sm:$0xff]
    %vm47 = vcmask 261120
    %v49 = vsel %vm47, %v40, 0
    %v52 = vsel %vm47, %v41, 0
    %54 = vmatprep.subr.mxu0 0.0
    %55 = vmatpush1.msra.mxu0 %v42
    %56 = vmatprep.subr.mxu0 0.0
    %57 = vmatpush1.msra.mxu0 %v43
    %58 = vmatprep.subr.mxu0 0.0
    %59 = vmatpush1.msra.mxu0 %v44
    %60 = vmatprep.subr.mxu0 0.0
    %61 = vmatpush1.msra.mxu0 %v45
    %62 = vmatprep.subr.mxu0 0.0
    %63 = vmatpush1.msra.mxu0 0.0
    %64 = vmatprep.subr.mxu0 0.0
    %65 = vmatpush1.msra.mxu0 0.0
    %66 = vmatprep.subr.mxu0 0.0
    %67 = vmatpush1.msra.mxu0 0.0
    %68 = vmatprep.subr.mxu0 0.0
    %69 = vmatpush1.msra.mxu0 0.0
    %70 = vmatprep.subr.mxu0 0.0
    %71 = vmatpush1.msra.mxu0 0.0
    %72 = vmatprep.subr.mxu0 0.0
    %73 = vmatpush1.msra.mxu0 0.0
    %74 = vmatprep.subr.mxu0 0.0
    %75 = vmatpush1.msra.mxu0 0.0
    %76 = vmatprep.subr.mxu0 0.0
    %77 = vmatpush1.msra.mxu0 0.0
    %78 = vmatprep.subr.mxu0 0.0
    %79 = vmatpush1.msra.mxu0 0.0
    %80 = vmatprep.subr.mxu0 0.0
    %81 = vmatpush1.msra.mxu0 0.0
    %82 = vmatprep.subr.mxu0 0.0
    %83 = vmatpush1.msra.mxu0 0.0
    %84 = vmatprep.subr.mxu0 0.0
    %85 = vmatpush1.msra.mxu0 0.0
    %86 = vmatprep.subr.mxu0 0.0
    %87 = vmatpush1.msra.mxu0 0.0
    %88 = vmatprep.subr.mxu0 0.0
    %89 = vmatpush1.msra.mxu0 0.0
    %90 = vmatprep.subr.mxu0 0.0
    %91 = vmatpush1.msra.mxu0 0.0
    %92 = vmatprep.subr.mxu0 0.0
    %93 = vmatpush1.msra.mxu0 0.0
    %94 = vmatprep.subr.mxu0 0.0
    %95 = vmatpush1.msra.mxu0 0.0
    %96 = vmatprep.subr.mxu0 0.0
    %97 = vmatpush1.msra.mxu0 0.0
    %98 = vmatprep.subr.mxu0 0.0
    %99 = vmatpush1.msra.mxu0 0.0
    %100 = vmatprep.subr.mxu0 0.0
    %101 = vmatpush1.msra.mxu0 0.0
    %102 = vmatprep.subr.mxu0 0.0
    %103 = vmatpush1.msra.mxu0 0.0
    %104 = vmatprep.subr.mxu0 0.0
    %105 = vmatpush1.msra.mxu0 0.0
    %106 = vmatprep.subr.mxu0 0.0
    %107 = vmatpush1.msra.mxu0 0.0
    %108 = vmatprep.subr.mxu0 0.0
    %109 = vmatpush1.msra.mxu0 0.0
    %110 = vmatprep.subr.mxu0 0.0
    %111 = vmatpush1.msra.mxu0 0.0
    %112 = vmatprep.subr.mxu0 0.0
    %113 = vmatpush1.msra.mxu0 0.0
    %114 = vmatprep.subr.mxu0 0.0
    %115 = vmatpush1.msra.mxu0 0.0
    %116 = vmatprep.subr.mxu0 0.0
    %117 = vmatpush1.msra.mxu0 0.0
    %118 = vmatprep.mubr.f32.mxu0 0.0
    %119 = vmatmul.mubr.f32.gmra.mrb[0].mxu0 %v49
    %v120 = vpop.f32.mrb[0].mxu0
    %v121 = vadd.f32 %v46, %v120
    %v122 = vpop.f32.mrb[0].mxu0
    %123 = vmatprep.mubr.f32.mxu0 0.0
    %124 = vmatmul.mubr.f32.gmra.mrb[0].mxu0 %v52
    %v125 = vpop.f32.mrb[0].mxu0
    %v126 = vadd.f32 %v46, %v125
    %v127 = vpop.f32.mrb[0].mxu0
    %128 = vdwg.mxu0
    %v129 = vld [vmem:[#allocation5 + $0x120] sm:$0xff]
    %v130 = vld [vmem:[#allocation5 + $0x138] sm:$0xff]
    %v131 = vld [vmem:[#allocation5 + $0x150] sm:$0xff]
    %v132 = vld [vmem:[#allocation5 + $0x168] sm:$0xff]
    %v133 = vld [vmem:[#allocation5 + $0x180] sm:$0xff]
    %v134 = vld [vmem:[#allocation5 + $0x198] sm:$0xff]
    %v135 = vld [vmem:[#allocation5 + $0x1b0] sm:$0xff]
    %v136 = vld [vmem:[#allocation5 + $0x1c8] sm:$0xff]
    %145 = vrot.lane.b32.xlu0 %v129, 32
    %v146 = vpop.permute.xlu0 %145
    %147 = vrot.lane.b32.xlu0 %v130, 32
    %v148 = vpop.permute.xlu0 %147
    %149 = vrot.lane.b32.xlu0 %v131, 32
    %v150 = vpop.permute.xlu0 %149
    %151 = vrot.lane.b32.xlu0 %v132, 32
    %v152 = vpop.permute.xlu0 %151
    %153 = vrot.lane.b32.xlu0 %v133, 32
    %v154 = vpop.permute.xlu0 %153
    %155 = vrot.lane.b32.xlu0 %v134, 32
    %v156 = vpop.permute.xlu0 %155
    %157 = vrot.lane.b32.xlu0 %v135, 32
    %v158 = vpop.permute.xlu0 %157
    %159 = vrot.lane.b32.xlu0 %v136, 32
    %v160 = vpop.permute.xlu0 %159
    %v169 = vmul.f32 %v121, %v146
    %v170 = vmul.f32 %v126, %v148
    %v171 = vmul.f32 %v121, %v150
    %v172 = vmul.f32 %v126, %v152
    %v173 = vmul.f32 %v121, %v154
    %v174 = vmul.f32 %v126, %v156
    %v175 = vmul.f32 %v121, %v158
    %v176 = vmul.f32 %v126, %v160
    %v177 = vld [vmem:[#allocation5 + $0x1e0] sm:$0xff]
    %v178 = vld [vmem:[#allocation5 + $0x1f8] sm:$0xff]
    %187 = vrot.lane.b32.xlu0 %v169, 96
    %v188 = vpop.permute.xlu0 %187
    %189 = vrot.lane.b32.xlu0 %v170, 96
    %v190 = vpop.permute.xlu0 %189
    %191 = vrot.lane.b32.xlu0 %v171, 96
    %v192 = vpop.permute.xlu0 %191
    %193 = vrot.lane.b32.xlu0 %v172, 96
    %v194 = vpop.permute.xlu0 %193
    %195 = vrot.lane.b32.xlu0 %v173, 96
    %v196 = vpop.permute.xlu0 %195
    %197 = vrot.lane.b32.xlu0 %v174, 96
    %v198 = vpop.permute.xlu0 %197
    %199 = vrot.lane.b32.xlu0 %v175, 96
    %v200 = vpop.permute.xlu0 %199
    %201 = vrot.lane.b32.xlu0 %v176, 96
    %v202 = vpop.permute.xlu0 %201
    %v204 = vsel %vm47, %v121, 0
    %v207 = vsel %vm47, %v126, 0
    %v209 = vsel %vm47, %v188, 0
    %v211 = vsel %vm47, %v190, 0
    %v213 = vsel %vm47, %v192, 0
    %v215 = vsel %vm47, %v194, 0
    %v217 = vsel %vm47, %v196, 0
    %v219 = vsel %vm47, %v198, 0
    %v221 = vsel %vm47, %v200, 0
    %v223 = vsel %vm47, %v202, 0
    %225 = vmatprep.subr.mxu0 0.0
    %226 = vmatpush1.xpose.msra.mxu0 %v209
    %227 = vmatprep.subr.mxu0 0.0
    %228 = vmatpush1.xpose.msra.mxu0 %v211
    %229 = vmatprep.subr.mxu0 0.0
    %230 = vmatpush1.xpose.msra.mxu0 %v213
    %231 = vmatprep.subr.mxu0 0.0
    %232 = vmatpush1.xpose.msra.mxu0 %v215
    %233 = vmatprep.subr.mxu0 0.0
    %234 = vmatpush1.xpose.msra.mxu0 %v217
    %235 = vmatprep.subr.mxu0 0.0
    %236 = vmatpush1.xpose.msra.mxu0 %v219
    %237 = vmatprep.subr.mxu0 0.0
    %238 = vmatpush1.xpose.msra.mxu0 %v221
    %239 = vmatprep.subr.mxu0 0.0
    %240 = vmatpush1.xpose.msra.mxu0 %v223
    %241 = vmatprep.subr.mxu0 0.0
    %242 = vmatpush1.xpose.msra.mxu0 0.0
    %243 = vmatprep.subr.mxu0 0.0
    %244 = vmatpush1.xpose.msra.mxu0 0.0
    %245 = vmatprep.subr.mxu0 0.0
    %246 = vmatpush1.xpose.msra.mxu0 0.0
    %247 = vmatprep.subr.mxu0 0.0
    %248 = vmatpush1.xpose.msra.mxu0 0.0
    %249 = vmatprep.subr.mxu0 0.0
    %250 = vmatpush1.xpose.msra.mxu0 0.0
    %251 = vmatprep.subr.mxu0 0.0
    %252 = vmatpush1.xpose.msra.mxu0 0.0
    %253 = vmatprep.subr.mxu0 0.0
    %254 = vmatpush1.xpose.msra.mxu0 0.0
    %255 = vmatprep.subr.mxu0 0.0
    %256 = vmatpush1.xpose.msra.mxu0 0.0
    %257 = vmatprep.subr.mxu0 0.0
    %258 = vmatpush1.xpose.msra.mxu0 0.0
    %259 = vmatprep.subr.mxu0 0.0
    %260 = vmatpush1.xpose.msra.mxu0 0.0
    %261 = vmatprep.subr.mxu0 0.0
    %262 = vmatpush1.xpose.msra.mxu0 0.0
    %263 = vmatprep.subr.mxu0 0.0
    %264 = vmatpush1.xpose.msra.mxu0 0.0
    %265 = vmatprep.subr.mxu0 0.0
    %266 = vmatpush1.xpose.msra.mxu0 0.0
    %267 = vmatprep.subr.mxu0 0.0
    %268 = vmatpush1.xpose.msra.mxu0 0.0
    %269 = vmatprep.subr.mxu0 0.0
    %270 = vmatpush1.xpose.msra.mxu0 0.0
    %271 = vmatprep.subr.mxu0 0.0
    %272 = vmatpush1.xpose.msra.mxu0 0.0
    %273 = vmatprep.subr.mxu0 0.0
    %274 = vmatpush1.xpose.msra.mxu0 0.0
    %275 = vmatprep.subr.mxu0 0.0
    %276 = vmatpush1.xpose.msra.mxu0 0.0
    %277 = vmatprep.subr.mxu0 0.0
    %278 = vmatpush1.xpose.msra.mxu0 0.0
    %279 = vmatprep.subr.mxu0 0.0
    %280 = vmatpush1.xpose.msra.mxu0 0.0
    %281 = vmatprep.subr.mxu0 0.0
    %282 = vmatpush1.xpose.msra.mxu0 0.0
    %283 = vmatprep.subr.mxu0 0.0
    %284 = vmatpush1.xpose.msra.mxu0 0.0
    %285 = vmatprep.subr.mxu0 0.0
    %286 = vmatpush1.xpose.msra.mxu0 0.0
    %287 = vmatprep.subr.mxu0 0.0
    %288 = vmatpush1.xpose.msra.mxu0 0.0
    %289 = vmatprep.mubr.f32.mxu0 0.0
    %290 = vmatmul.mubr.f32.gmra.mrb[0].mxu0 %v204
    %v291 = vpop.f32.mrb[0].mxu0
    %v292 = vadd.f32 %v177, %v291
    %v293 = vpop.f32.mrb[0].mxu0
    %294 = vmatprep.mubr.f32.mxu0 0.0
    %295 = vmatmul.mubr.f32.gmra.mrb[0].mxu0 %v207
    %v296 = vpop.f32.mrb[0].mxu0
    %v297 = vadd.f32 %v178, %v296
    %v298 = vpop.f32.mrb[0].mxu0
    %299 = vdwg.mxu0
    %vm300 = vcmask 523264
    %v301 = vsel %vm300, %v292, -inf
    %302 = vmax.xlane.f32.xlu0 %v301
    %v303 = vpop.xlane.xlu0 %302
    %v304 = vsel %vm300, %v297, -inf
    %305 = vmax.xlane.f32.xlu0 %v304
    %v306 = vpop.xlane.xlu0 %305
    %v307 = vsub.f32 %v292, %v303
    %v308 = vsub.f32 %v297, %v306
    %v309 = vmul.f32 %v307, 1.442695
    %v310 = vpow.pop %v309
    %v311 = vmul.f32 %v308, 1.442695
    %v312 = vpow.pop %v311
    %313 = vrot.lane.b32.xlu0 %v169, 64
    %v314 = vpop.permute.xlu0 %313
    %315 = vrot.lane.b32.xlu0 %v170, 64
    %v316 = vpop.permute.xlu0 %315
    %317 = vrot.lane.b32.xlu0 %v171, 64
    %v318 = vpop.permute.xlu0 %317
    %319 = vrot.lane.b32.xlu0 %v172, 64
    %v320 = vpop.permute.xlu0 %319
    %321 = vrot.lane.b32.xlu0 %v173, 64
    %v322 = vpop.permute.xlu0 %321
    %323 = vrot.lane.b32.xlu0 %v174, 64
    %v324 = vpop.permute.xlu0 %323
    %325 = vrot.lane.b32.xlu0 %v175, 64
    %v326 = vpop.permute.xlu0 %325
    %327 = vrot.lane.b32.xlu0 %v176, 64
    %v328 = vpop.permute.xlu0 %327
    %v338 = vsel %vm300, %v310, 0
    %v341 = vsel %vm300, %v312, 0
    %343 = vmatprep.subr.mxu0 0.0
    %344 = vmatpush1.msra.mxu0 %v314
    %345 = vmatprep.subr.mxu0 0.0
    %346 = vmatpush1.msra.mxu0 %v316
    %347 = vmatprep.subr.mxu0 0.0
    %348 = vmatpush1.msra.mxu0 %v318
    %349 = vmatprep.subr.mxu0 0.0
    %350 = vmatpush1.msra.mxu0 %v320
    %351 = vmatprep.subr.mxu0 0.0
    %352 = vmatpush1.msra.mxu0 %v322
    %353 = vmatprep.subr.mxu0 0.0
    %354 = vmatpush1.msra.mxu0 %v324
    %355 = vmatprep.subr.mxu0 0.0
    %356 = vmatpush1.msra.mxu0 %v326
    %357 = vmatprep.subr.mxu0 0.0
    %358 = vmatpush1.msra.mxu0 %v328
    %359 = vmatprep.subr.mxu0 0.0
    %360 = vmatpush1.msra.mxu0 0.0
    %361 = vmatprep.subr.mxu0 0.0
    %362 = vmatpush1.msra.mxu0 0.0
    %363 = vmatprep.subr.mxu0 0.0
    %364 = vmatpush1.msra.mxu0 0.0
    %365 = vmatprep.subr.mxu0 0.0
    %366 = vmatpush1.msra.mxu0 0.0
    %367 = vmatprep.subr.mxu0 0.0
    %368 = vmatpush1.msra.mxu0 0.0
    %369 = vmatprep.subr.mxu0 0.0
    %370 = vmatpush1.msra.mxu0 0.0
    %371 = vmatprep.subr.mxu0 0.0
    %372 = vmatpush1.msra.mxu0 0.0
    %373 = vmatprep.subr.mxu0 0.0
    %374 = vmatpush1.msra.mxu0 0.0
    %375 = vmatprep.subr.mxu0 0.0
    %376 = vmatpush1.msra.mxu0 0.0
    %377 = vmatprep.subr.mxu0 0.0
    %378 = vmatpush1.msra.mxu0 0.0
    %379 = vmatprep.subr.mxu0 0.0
    %380 = vmatpush1.msra.mxu0 0.0
    %381 = vmatprep.subr.mxu0 0.0
    %382 = vmatpush1.msra.mxu0 0.0
    %383 = vmatprep.subr.mxu0 0.0
    %384 = vmatpush1.msra.mxu0 0.0
    %385 = vmatprep.subr.mxu0 0.0
    %386 = vmatpush1.msra.mxu0 0.0
    %387 = vmatprep.subr.mxu0 0.0
    %388 = vmatpush1.msra.mxu0 0.0
    %389 = vmatprep.subr.mxu0 0.0
    %390 = vmatpush1.msra.mxu0 0.0
    %391 = vmatprep.subr.mxu0 0.0
    %392 = vmatpush1.msra.mxu0 0.0
    %393 = vmatprep.subr.mxu0 0.0
    %394 = vmatpush1.msra.mxu0 0.0
    %395 = vmatprep.subr.mxu0 0.0
    %396 = vmatpush1.msra.mxu0 0.0
    %397 = vmatprep.subr.mxu0 0.0
    %398 = vmatpush1.msra.mxu0 0.0
    %399 = vmatprep.subr.mxu0 0.0
    %400 = vmatpush1.msra.mxu0 0.0
    %401 = vmatprep.subr.mxu0 0.0
    %402 = vmatpush1.msra.mxu0 0.0
    %403 = vmatprep.subr.mxu0 0.0
    %404 = vmatpush1.msra.mxu0 0.0
    %405 = vmatprep.subr.mxu0 0.0
    %406 = vmatpush1.msra.mxu0 0.0
    %407 = vmatprep.mubr.f32.mxu0 0.0
    %408 = vmatmul.mubr.f32.gmra.mrb[0].mxu0 %v338
    %v409 = vpop.f32.mrb[0].mxu0
    %v410 = vadd.f32 0.0, %v409
    %v411 = vpop.f32.mrb[0].mxu0
    %412 = vmatprep.mubr.f32.mxu0 0.0
    %413 = vmatmul.mubr.f32.gmra.mrb[0].mxu0 %v341
    %v414 = vpop.f32.mrb[0].mxu0
    %v415 = vadd.f32 0.0, %v414
    %v416 = vpop.f32.mrb[0].mxu0
    %417 = vdwg.mxu0
    %v418 = vmax.f32 %v410, 1e-30
    %v419 = vmax.f32 %v415, 1e-30
    %v420 = vrcp.pop %v418
    %v421 = vrcp.pop %v419
    %424 = vrot.lane.b32.xlu0 %v420, 96
    %v425 = vpop.permute.xlu0 %424
    %426 = vrot.lane.b32.xlu0 %v421, 96
    %v427 = vpop.permute.xlu0 %426
    %v430 = vmul.f32 %v410, %v425
    %v431 = vmul.f32 %v415, %v427
    %v432 = vld [vmem:[#allocation5 + $0x8] sm:$0xff]
    %v433 = vld [vmem:[#allocation5 + $0x20] sm:$0xff]
    %v434 = vld [vmem:[#allocation5 + $0x38] sm:$0xff]
    %v435 = vld [vmem:[#allocation5 + $0x50] sm:$0xff]
    %v436 = vld [vmem:[#allocation5 + $0x211] ss:$0 sm:$0xff]
    %v438 = vsel %vm47, %v430, 0
    %v441 = vsel %vm47, %v431, 0
    %443 = vmatprep.subr.mxu0 0.0
    %444 = vmatpush1.msra.mxu0 %v432
    %445 = vmatprep.subr.mxu0 0.0
    %446 = vmatpush1.msra.mxu0 %v433
    %447 = vmatprep.subr.mxu0 0.0
    %448 = vmatpush1.msra.mxu0 %v434
    %449 = vmatprep.subr.mxu0 0.0
    %450 = vmatpush1.msra.mxu0 %v435
    %451 = vmatprep.subr.mxu0 0.0
    %452 = vmatpush1.msra.mxu0 0.0
    %453 = vmatprep.subr.mxu0 0.0
    %454 = vmatpush1.msra.mxu0 0.0
    %455 = vmatprep.subr.mxu0 0.0
    %456 = vmatpush1.msra.mxu0 0.0
    %457 = vmatprep.subr.mxu0 0.0
    %458 = vmatpush1.msra.mxu0 0.0
    %459 = vmatprep.subr.mxu0 0.0
    %460 = vmatpush1.msra.mxu0 0.0
    %461 = vmatprep.subr.mxu0 0.0
    %462 = vmatpush1.msra.mxu0 0.0
    %463 = vmatprep.subr.mxu0 0.0
    %464 = vmatpush1.msra.mxu0 0.0
    %465 = vmatprep.subr.mxu0 0.0
    %466 = vmatpush1.msra.mxu0 0.0
    %467 = vmatprep.subr.mxu0 0.0
    %468 = vmatpush1.msra.mxu0 0.0
    %469 = vmatprep.subr.mxu0 0.0
    %470 = vmatpush1.msra.mxu0 0.0
    %471 = vmatprep.subr.mxu0 0.0
    %472 = vmatpush1.msra.mxu0 0.0
    %473 = vmatprep.subr.mxu0 0.0
    %474 = vmatpush1.msra.mxu0 0.0
    %475 = vmatprep.subr.mxu0 0.0
    %476 = vmatpush1.msra.mxu0 0.0
    %477 = vmatprep.subr.mxu0 0.0
    %478 = vmatpush1.msra.mxu0 0.0
    %479 = vmatprep.subr.mxu0 0.0
    %480 = vmatpush1.msra.mxu0 0.0
    %481 = vmatprep.subr.mxu0 0.0
    %482 = vmatpush1.msra.mxu0 0.0
    %483 = vmatprep.subr.mxu0 0.0
    %484 = vmatpush1.msra.mxu0 0.0
    %485 = vmatprep.subr.mxu0 0.0
    %486 = vmatpush1.msra.mxu0 0.0
    %487 = vmatprep.subr.mxu0 0.0
    %488 = vmatpush1.msra.mxu0 0.0
    %489 = vmatprep.subr.mxu0 0.0
    %490 = vmatpush1.msra.mxu0 0.0
    %491 = vmatprep.subr.mxu0 0.0
    %492 = vmatpush1.msra.mxu0 0.0
    %493 = vmatprep.subr.mxu0 0.0
    %494 = vmatpush1.msra.mxu0 0.0
    %495 = vmatprep.subr.mxu0 0.0
    %496 = vmatpush1.msra.mxu0 0.0
    %497 = vmatprep.subr.mxu0 0.0
    %498 = vmatpush1.msra.mxu0 0.0
    %499 = vmatprep.subr.mxu0 0.0
    %500 = vmatpush1.msra.mxu0 0.0
    %501 = vmatprep.subr.mxu0 0.0
    %502 = vmatpush1.msra.mxu0 0.0
    %503 = vmatprep.subr.mxu0 0.0
    %504 = vmatpush1.msra.mxu0 0.0
    %505 = vmatprep.subr.mxu0 0.0
    %506 = vmatpush1.msra.mxu0 0.0
    %507 = vmatprep.mubr.f32.mxu0 0.0
    %508 = vmatmul.mubr.f32.gmra.mrb[0].mxu0 %v438
    %v509 = vpop.f32.mrb[0].mxu0
    %v510 = vadd.f32 %v436, %v509
    %v511 = vpop.f32.mrb[0].mxu0
    %512 = vmatprep.mubr.f32.mxu0 0.0
    %513 = vmatmul.mubr.f32.gmra.mrb[0].mxu0 %v441
    %v514 = vpop.f32.mrb[0].mxu0
    %v515 = vadd.f32 %v436, %v514
    %v516 = vpop.f32.mrb[0].mxu0
    %517 = vdwg.mxu0
    %v518 = vadd.f32 %v40, %v510
    %v519 = vadd.f32 %v41, %v515
    %v520 = vsel %vm47, %v518, 0.0
    %521 = vadd.xlane.f32.xlu0 %v520
    %v522 = vpop.xlane.xlu0 %521
    %v523 = vsel %vm47, %v519, 0.0
    %524 = vadd.xlane.f32.xlu0 %v523
    %v525 = vpop.xlane.xlu0 %524
    %v526 = vrcp.pop 32.0
    %v527 = vmul.f32 %v522, %v526
    %v528 = vmul.f32 %v525, %v526
    %v529 = vsub.f32 %v518, %v527
    %v530 = vsub.f32 %v519, %v528
    %v531 = vmul.f32 %v529, %v529
    %v532 = vmul.f32 %v530, %v530
    %v533 = vsel %vm47, %v531, 0.0
    %534 = vadd.xlane.f32.xlu0 %v533
    %v535 = vpop.xlane.xlu0 %534
    %v536 = vsel %vm47, %v532, 0.0
    %537 = vadd.xlane.f32.xlu0 %v536
    %v538 = vpop.xlane.xlu0 %537
    %v539 = vmul.f32 %v535, %v526
    %v540 = vmul.f32 %v538, %v526
    %v541 = vld [vmem:[#allocation5 + $0x212] ss:$0 sm:$0xff]
    %v542 = vld [vmem:[#allocation5 + $0x213] ss:$0 sm:$0xff]
    %v543 = vadd.f32 %v539, 1e-05
    %v544 = vadd.f32 %v540, 1e-05
    %v545 = vrsqrt.pop %v543
    %v546 = vrsqrt.pop %v544
    %v547 = vmul.f32 %v529, %v545
    %v548 = vmul.f32 %v530, %v546
    %v549 = vmul.f32 %v547, %v541
    %v550 = vmul.f32 %v548, %v541
    %v551 = vadd.f32 %v549, %v542
    %v552 = vadd.f32 %v550, %v542
    %v553 = vld [vmem:[#allocation5 + $0x10] sm:$0xff]
    %v554 = vld [vmem:[#allocation5 + $0x28] sm:$0xff]
    %v555 = vld [vmem:[#allocation5 + $0x40] sm:$0xff]
    %v556 = vld [vmem:[#allocation5 + $0x58] sm:$0xff]
    %v557 = vld [vmem:[#allocation5 + $0x214] ss:$0 sm:$0xff]
    %v559 = vsel %vm47, %v551, 0
    %v562 = vsel %vm47, %v552, 0
    %564 = vmatprep.subr.mxu0 0.0
    %565 = vmatpush1.msra.mxu0 %v553
    %566 = vmatprep.subr.mxu0 0.0
    %567 = vmatpush1.msra.mxu0 %v554
    %568 = vmatprep.subr.mxu0 0.0
    %569 = vmatpush1.msra.mxu0 %v555
    %570 = vmatprep.subr.mxu0 0.0
    %571 = vmatpush1.msra.mxu0 %v556
    %572 = vmatprep.subr.mxu0 0.0
    %573 = vmatpush1.msra.mxu0 0.0
    %574 = vmatprep.subr.mxu0 0.0
    %575 = vmatpush1.msra.mxu0 0.0
    %576 = vmatprep.subr.mxu0 0.0
    %577 = vmatpush1.msra.mxu0 0.0
    %578 = vmatprep.subr.mxu0 0.0
    %579 = vmatpush1.msra.mxu0 0.0
    %580 = vmatprep.subr.mxu0 0.0
    %581 = vmatpush1.msra.mxu0 0.0
    %582 = vmatprep.subr.mxu0 0.0
    %583 = vmatpush1.msra.mxu0 0.0
    %584 = vmatprep.subr.mxu0 0.0
    %585 = vmatpush1.msra.mxu0 0.0
    %586 = vmatprep.subr.mxu0 0.0
    %587 = vmatpush1.msra.mxu0 0.0
    %588 = vmatprep.subr.mxu0 0.0
    %589 = vmatpush1.msra.mxu0 0.0
    %590 = vmatprep.subr.mxu0 0.0
    %591 = vmatpush1.msra.mxu0 0.0
    %592 = vmatprep.subr.mxu0 0.0
    %593 = vmatpush1.msra.mxu0 0.0
    %594 = vmatprep.subr.mxu0 0.0
    %595 = vmatpush1.msra.mxu0 0.0
    %596 = vmatprep.subr.mxu0 0.0
    %597 = vmatpush1.msra.mxu0 0.0
    %598 = vmatprep.subr.mxu0 0.0
    %599 = vmatpush1.msra.mxu0 0.0
    %600 = vmatprep.subr.mxu0 0.0
    %601 = vmatpush1.msra.mxu0 0.0
    %602 = vmatprep.subr.mxu0 0.0
    %603 = vmatpush1.msra.mxu0 0.0
    %604 = vmatprep.subr.mxu0 0.0
    %605 = vmatpush1.msra.mxu0 0.0
    %606 = vmatprep.subr.mxu0 0.0
    %607 = vmatpush1.msra.mxu0 0.0
    %608 = vmatprep.subr.mxu0 0.0
    %609 = vmatpush1.msra.mxu0 0.0
    %610 = vmatprep.subr.mxu0 0.0
    %611 = vmatpush1.msra.mxu0 0.0
    %612 = vmatprep.subr.mxu0 0.0
    %613 = vmatpush1.msra.mxu0 0.0
    %614 = vmatprep.subr.mxu0 0.0
    %615 = vmatpush1.msra.mxu0 0.0
    %616 = vmatprep.subr.mxu0 0.0
    %617 = vmatpush1.msra.mxu0 0.0
    %618 = vmatprep.subr.mxu0 0.0
    %619 = vmatpush1.msra.mxu0 0.0
    %620 = vmatprep.subr.mxu0 0.0
    %621 = vmatpush1.msra.mxu0 0.0
    %622 = vmatprep.subr.mxu0 0.0
    %623 = vmatpush1.msra.mxu0 0.0
    %624 = vmatprep.subr.mxu0 0.0
    %625 = vmatpush1.msra.mxu0 0.0
    %626 = vmatprep.subr.mxu0 0.0
    %627 = vmatpush1.msra.mxu0 0.0
    %628 = vmatprep.mubr.f32.mxu0 0.0
    %629 = vmatmul.mubr.f32.gmra.mrb[0].mxu0 %v559
    %v630 = vpop.f32.mrb[0].mxu0
    %v631 = vadd.f32 %v557, %v630
    %v632 = vpop.f32.mrb[0].mxu0
    %633 = vmatprep.mubr.f32.mxu0 0.0
    %634 = vmatmul.mubr.f32.gmra.mrb[0].mxu0 %v562
    %v635 = vpop.f32.mrb[0].mxu0
    %v636 = vadd.f32 %v557, %v635
    %v637 = vpop.f32.mrb[0].mxu0
    %638 = vdwg.mxu0
    %v639 = vmul.f32 %v631, 0.5
    %v640 = vmul.f32 %v636, 0.5
    %v641 = vmul.f32 %v631, 0.70710677
    %v642 = vmul.f32 %v636, 0.70710677
    %v643 = verf.f32.pop %v641
    %v644 = verf.f32.pop %v642
    %v645 = vadd.f32 %v643, 1.0
    %v646 = vadd.f32 %v644, 1.0
    %v647 = vmul.f32 %v639, %v645
    %v648 = vmul.f32 %v640, %v646
    %v649 = vld [vmem:[#allocation5 + $0x60] sm:$0xff]
    %v650 = vld [vmem:[#allocation5 + $0x78] sm:$0xff]
    %v651 = vld [vmem:[#allocation5 + $0x90] sm:$0xff]
    %v652 = vld [vmem:[#allocation5 + $0xa8] sm:$0xff]
    %v653 = vld [vmem:[#allocation5 + $0xc0] sm:$0xff]
    %v654 = vld [vmem:[#allocation5 + $0xd8] sm:$0xff]
    %v655 = vld [vmem:[#allocation5 + $0xf0] sm:$0xff]
    %v656 = vld [vmem:[#allocation5 + $0x108] sm:$0xff]
    %v657 = vld [vmem:[#allocation5 + $0x215] ss:$0 sm:$0xff]
    %v659 = vsel %vm300, %v647, 0
    %v662 = vsel %vm300, %v648, 0
    %664 = vmatprep.subr.mxu0 0.0
    %665 = vmatpush1.msra.mxu0 %v649
    %666 = vmatprep.subr.mxu0 0.0
    %667 = vmatpush1.msra.mxu0 %v650
    %668 = vmatprep.subr.mxu0 0.0
    %669 = vmatpush1.msra.mxu0 %v651
    %670 = vmatprep.subr.mxu0 0.0
    %671 = vmatpush1.msra.mxu0 %v652
    %672 = vmatprep.subr.mxu0 0.0
    %673 = vmatpush1.msra.mxu0 %v653
    %674 = vmatprep.subr.mxu0 0.0
    %675 = vmatpush1.msra.mxu0 %v654
    %676 = vmatprep.subr.mxu0 0.0
    %677 = vmatpush1.msra.mxu0 %v655
    %678 = vmatprep.subr.mxu0 0.0
    %679 = vmatpush1.msra.mxu0 %v656
    %680 = vmatprep.subr.mxu0 0.0
    %681 = vmatpush1.msra.mxu0 0.0
    %682 = vmatprep.subr.mxu0 0.0
    %683 = vmatpush1.msra.mxu0 0.0
    %684 = vmatprep.subr.mxu0 0.0
    %685 = vmatpush1.msra.mxu0 0.0
    %686 = vmatprep.subr.mxu0 0.0
    %687 = vmatpush1.msra.mxu0 0.0
    %688 = vmatprep.subr.mxu0 0.0
    %689 = vmatpush1.msra.mxu0 0.0
    %690 = vmatprep.subr.mxu0 0.0
    %691 = vmatpush1.msra.mxu0 0.0
    %692 = vmatprep.subr.mxu0 0.0
    %693 = vmatpush1.msra.mxu0 0.0
    %694 = vmatprep.subr.mxu0 0.0
    %695 = vmatpush1.msra.mxu0 0.0
    %696 = vmatprep.subr.mxu0 0.0
    %697 = vmatpush1.msra.mxu0 0.0
    %698 = vmatprep.subr.mxu0 0.0
    %699 = vmatpush1.msra.mxu0 0.0
    %700 = vmatprep.subr.mxu0 0.0
    %701 = vmatpush1.msra.mxu0 0.0
    %702 = vmatprep.subr.mxu0 0.0
    %703 = vmatpush1.msra.mxu0 0.0
    %704 = vmatprep.subr.mxu0 0.0
    %705 = vmatpush1.msra.mxu0 0.0
    %706 = vmatprep.subr.mxu0 0.0
    %707 = vmatpush1.msra.mxu0 0.0
    %708 = vmatprep.subr.mxu0 0.0
    %709 = vmatpush1.msra.mxu0 0.0
    %710 = vmatprep.subr.mxu0 0.0
    %711 = vmatpush1.msra.mxu0 0.0
    %712 = vmatprep.subr.mxu0 0.0
    %713 = vmatpush1.msra.mxu0 0.0
    %714 = vmatprep.subr.mxu0 0.0
    %715 = vmatpush1.msra.mxu0 0.0
    %716 = vmatprep.subr.mxu0 0.0
    %717 = vmatpush1.msra.mxu0 0.0
    %718 = vmatprep.subr.mxu0 0.0
    %719 = vmatpush1.msra.mxu0 0.0
    %720 = vmatprep.subr.mxu0 0.0
    %721 = vmatpush1.msra.mxu0 0.0
    %722 = vmatprep.subr.mxu0 0.0
    %723 = vmatpush1.msra.mxu0 0.0
    %724 = vmatprep.subr.mxu0 0.0
    %725 = vmatpush1.msra.mxu0 0.0
    %726 = vmatprep.subr.mxu0 0.0
    %727 = vmatpush1.msra.mxu0 0.0
    %728 = vmatprep.mubr.f32.mxu0 0.0
    %729 = vmatmul.mubr.f32.gmra.mrb[0].mxu0 %v659
    %v730 = vpop.f32.mrb[0].mxu0
    %v731 = vadd.f32 %v657, %v730
    %v732 = vpop.f32.mrb[0].mxu0
    %733 = vmatprep.mubr.f32.mxu0 0.0
    %734 = vmatmul.mubr.f32.gmra.mrb[0].mxu0 %v662
    %v735 = vpop.f32.mrb[0].mxu0
    %v736 = vadd.f32 %v657, %v735
    %v737 = vpop.f32.mrb[0].mxu0
    %738 = vdwg.mxu0
    %v739 = vadd.f32 %v551, %v731
    %v740 = vadd.f32 %v552, %v736
    %741 = vst.msk [vmem:[#allocation7] sm:$0xff] %vm47, %v739
    %742 = vst.msk [vmem:[#allocation7 + $0x8] sm:$0xff] %vm47, %v740
    // Predicated region
    $region18: #{tpu_custom_call.1} parent=1 // pred_check
      _
    $region19: #{tpu_custom_call.1} parent=1 // pred_check_branch
      %744 = sbr.rel (0) target = $region21
    $region20: #{tpu_custom_call.1} parent=1 // pred_region
      %s746 = ssub.s32 256, 256
      %747 = vsyncadd [#allocation4], %s746
      %s748 = sshll.u32 [#allocation7], 4
      %s749 = int_to_ptr.vmem [resolvable:$true] %s748
      %754 = dma.vmem_to_hbm [thread:$0]  %s749, 256, %s2, [#allocation4], 128, 128, 8
    $region21: #{tpu_custom_call.1} parent=1 // pred_fallthru
      _
    // Predicated region
    $region22: #{tpu_custom_call.1} parent=1 // pred_check
      _
    $region23: #{tpu_custom_call.1} parent=1 // pred_check_branch
      %756 = sbr.rel (0) target = $region25
    $region24: #{tpu_custom_call.1} parent=1 // pred_region
      %757 = dma.done [#allocation4], 256
    $region25: #{tpu_custom_call.1} parent=1 // pred_fallthru
      _
    %758 = vsyncpa [#allocation3], 1
    %759 = vsyncpa [#allocation6], 1
    %760 = vsyncpa [#allocation4], 1

</llo_original>
